<compile_context>
chip_gen: v5e
topology: v5e:2x2
jax: 0.10.0
libtpu: 0.0.40
codegen_flags: <defaults>
</compile_context>

<pallas_src>
import math

import jax
import jax.numpy as jnp
from jax.experimental import pallas as pl
from jax.experimental.pallas import tpu as pltpu


def _round_up(x, m):
    return ((x + m - 1) // m) * m


def gcn_kernel(x_ref, adj_ref, w_ref, b_ref, o_ref):
    # support = x_tile @ adj          (MXU, f32 accumulation)
    support = jnp.dot(x_ref[...], adj_ref[...],
                      preferred_element_type=jnp.float32)
    # output = support @ weight       (cast support back to the operand dtype so
    # the second matmul also uses the fast MXU path when inputs are bf16)
    out = jnp.dot(support.astype(w_ref.dtype), w_ref[...],
                  preferred_element_type=jnp.float32)
    # bias add + ReLU in f32 (VPU f32 path; cast only at the final store)
    out = out + b_ref[...]
    o_ref[...] = jnp.maximum(out, 0.0).astype(o_ref.dtype)


def _pick_tile_m(n, m_p, fi_p, fo_p, in_itemsize, budget_bytes, tm_max):
    """Largest row tile (multiple of 8) whose per-step VMEM footprint fits."""
    # adj / weight / bias are grid-resident (budget 2x to be conservative).
    resident = 2 * (m_p * fi_p + fi_p * fo_p) * in_itemsize + 2 * fo_p * 4
    tm = min(_round_up(n, 8), tm_max)
    while tm > 8:
        per_tile = (2 * tm * m_p * in_itemsize   # x tile, double-buffered
                    + 2 * tm * fo_p * 4          # out tile, double-buffered (f32)
                    + tm * fi_p * 4)             # `support` intermediate (f32)
        if resident + per_tile <= budget_bytes:
            break
        tm //= 2
    return max(tm, 8)


def graph_convolution(x, adj, weight, bias=None, *,
                      compute_dtype=None,
                      tm_max=256,
                      vmem_limit_bytes=48 << 20):
    """ReLU((x @ adj) @ weight + bias) -- GraphConvolution.forward."""
    N, M = x.shape
    M2, f_in = adj.shape
    f_in2, f_out = weight.shape
    assert M2 == M and f_in2 == f_in

    in_dtype = jnp.dtype(compute_dtype) if compute_dtype is not None else x.dtype

    # Lane-dense padding: last dims -> multiples of 128 (exact: zero padding).
    Mp = _round_up(M, 128)
    Fip = _round_up(f_in, 128)
    Fop = _round_up(f_out, 128)

    TM = _pick_tile_m(N, Mp, Fip, Fop, jnp.dtype(in_dtype).itemsize,
                      int(0.75 * vmem_limit_bytes), tm_max)
    Np = _round_up(N, TM)

    xp = jnp.zeros((Np, Mp), in_dtype).at[:N, :M].set(x.astype(in_dtype))
    adjp = jnp.zeros((Mp, Fip), in_dtype).at[:M, :f_in].set(adj.astype(in_dtype))
    wp = jnp.zeros((Fip, Fop), in_dtype).at[:f_in, :f_out].set(
        weight.astype(in_dtype))
    if bias is None:
        bias = jnp.zeros((f_out,), jnp.float32)
    bp = jnp.zeros((1, Fop), jnp.float32).at[0, :f_out].set(
        bias.astype(jnp.float32))

    grid = (Np // TM,)
    out = pl.pallas_call(
        gcn_kernel,
        out_shape=jax.ShapeDtypeStruct((Np, Fop), jnp.float32),
        grid=grid,
        in_specs=[
            pl.BlockSpec((TM, Mp), lambda i: (i, 0)),    # row tile, pipelined
            pl.BlockSpec((Mp, Fip), lambda i: (0, 0)),   # VMEM-resident
            pl.BlockSpec((Fip, Fop), lambda i: (0, 0)),  # VMEM-resident
            pl.BlockSpec((1, Fop), lambda i: (0, 0)),    # VMEM-resident
        ],
        out_specs=pl.BlockSpec((TM, Fop), lambda i: (i, 0)),
        compiler_params=pltpu.CompilerParams(
            dimension_semantics=("parallel",),           # megacore-shardable
            vmem_limit_bytes=vmem_limit_bytes),
    )(xp, adjp, wp, bp)
    return out[:N, :f_out]


def init_params(key, f_in, f_out):
    # Deterministic replica of nn.init.kaiming_uniform_(weight, nonlinearity='relu')
    # For a 2-D (f_in, f_out) tensor torch uses fan_in = f_out (dim 1):
    #   bound = sqrt(2) * sqrt(3 / fan_in)
    fan_in = f_out
    bound = math.sqrt(2.0) * math.sqrt(3.0 / fan_in)
    weight = jax.random.uniform(key, (f_in, f_out), jnp.float32,
                                minval=-bound, maxval=bound)
    bias = jnp.zeros((f_out,), jnp.float32)   # nn.init.zeros_
    return weight, bias


if __name__ == "__main__":
    key = jax.random.PRNGKey(0)
    k_x, k_adj, k_w, k_x2, k_adj2, k_w2 = jax.random.split(key, 6)

    # ---- small shapes consistent with forward: input (N, M), adj (M, f_in) ----
    N, M, f_in, f_out = 8, 8, 16, 32
    x = jax.random.normal(k_x, (N, M), jnp.float32)
    adj = jax.random.normal(k_adj, (M, f_in), jnp.float32)
    weight, bias = init_params(k_w, f_in, f_out)

    # f32 path (matches PyTorch f32 semantics).
    out = jax.block_until_ready(graph_convolution(x, adj, weight, bias))
    ref = jnp.maximum((x @ adj) @ weight + bias, 0.0)
    assert out.shape == (N, f_out)
    assert jnp.allclose(out, ref, atol=1e-4, rtol=1e-4)

    # bf16-input / f32-accumulate fast path (perf recommendation).
    out_bf16 = jax.block_until_ready(
        graph_convolution(x, adj, weight, bias, compute_dtype=jnp.bfloat16))
    xb, ab, wb = (t.astype(jnp.bfloat16) for t in (x, adj, weight))
    sup = jnp.dot(xb, ab, preferred_element_type=jnp.float32)
    ref_b = jnp.maximum(
        jnp.dot(sup.astype(jnp.bfloat16), wb,
                preferred_element_type=jnp.float32) + bias, 0.0)
    assert out_bf16.shape == (N, f_out)
    assert jnp.allclose(out_bf16, ref_b, atol=1e-2, rtol=1e-2)

    # ---- larger shapes: exercise multi-step row-tiled grid / pipelining ----
    N2, M2, fi2, fo2 = 512, 256, 384, 256
    x2 = jax.random.normal(k_x2, (N2, M2), jnp.float32)
    adj2 = jax.random.normal(k_adj2, (M2, fi2), jnp.float32)
    w2, b2 = init_params(k_w2, fi2, fo2)
    out2 = jax.block_until_ready(
        graph_convolution(x2, adj2, w2, b2, tm_max=128))
    ref2 = jnp.maximum((x2 @ adj2) @ w2 + b2, 0.0)
    assert out2.shape == (N2, fo2)
    # Scale-aware check (robust to XLA's f32-matmul precision mode differences).
    max_err = jnp.max(jnp.abs(out2 - ref2))
    scale = jnp.max(jnp.abs(ref2)) + 1e-3
    assert float(max_err) <= 5e-3 * float(scale)

    print("KERNEL_OK")
</pallas_src>

<mosaic_0001>
module attributes {stable_mosaic.version = 11 : i64} {
  func.func @gcn_kernel(%arg0: i32, %arg1: memref<8x128xf32, #tpu.memory_space<vmem>>, %arg2: memref<128x128xf32, #tpu.memory_space<vmem>>, %arg3: memref<128x128xf32, #tpu.memory_space<vmem>>, %arg4: memref<1x128xf32, #tpu.memory_space<vmem>>, %arg5: memref<8x128xf32, #tpu.memory_space<vmem>>) attributes {dimension_semantics = [#tpu.dimension_semantics<parallel>], iteration_bounds = array<i64: 1>, scalar_prefetch = 0 : i64, scratch_operands = 0 : i64, tpu.core_type = #tpu.core_type<tc>, window_params = [{transform_indices = @transform_0, window_bounds = array<i64: 8, 128>}, {pipeline_mode = #tpu.pipeline_mode<synchronous>, transform_indices = @transform_1, window_bounds = array<i64: 128, 128>}, {pipeline_mode = #tpu.pipeline_mode<synchronous>, transform_indices = @transform_2, window_bounds = array<i64: 128, 128>}, {pipeline_mode = #tpu.pipeline_mode<synchronous>, transform_indices = @transform_3, window_bounds = array<i64: 1, 128>}, {transform_indices = @transform_4, window_bounds = array<i64: 8, 128>}]} {
    %c0 = arith.constant 0 : index
    %c0_0 = arith.constant 0 : index
    %0 = vector.load %arg1[%c0, %c0_0] : memref<8x128xf32, #tpu.memory_space<vmem>>, vector<8x128xf32>
    %c0_1 = arith.constant 0 : index
    %c0_2 = arith.constant 0 : index
    %1 = vector.load %arg2[%c0_1, %c0_2] : memref<128x128xf32, #tpu.memory_space<vmem>>, vector<128x128xf32>
    %cst = arith.constant dense<0.000000e+00> : vector<8x128xf32>
    %2 = tpu.matmul %0, %1, %cst {dimension_numbers = #tpu.dot_dimension_numbers<[1], [0], [0], [1], [0, 0, 1, 1], [], []>} : vector<8x128xf32>, vector<128x128xf32>, vector<8x128xf32> -> vector<8x128xf32>
    %c0_3 = arith.constant 0 : index
    %c0_4 = arith.constant 0 : index
    %3 = vector.load %arg3[%c0_3, %c0_4] : memref<128x128xf32, #tpu.memory_space<vmem>>, vector<128x128xf32>
    %cst_5 = arith.constant dense<0.000000e+00> : vector<8x128xf32>
    %4 = tpu.matmul %2, %3, %cst_5 {dimension_numbers = #tpu.dot_dimension_numbers<[1], [0], [0], [1], [0, 0, 1, 1], [], []>} : vector<8x128xf32>, vector<128x128xf32>, vector<8x128xf32> -> vector<8x128xf32>
    %c0_6 = arith.constant 0 : index
    %c0_7 = arith.constant 0 : index
    %5 = vector.load %arg4[%c0_6, %c0_7] : memref<1x128xf32, #tpu.memory_space<vmem>>, vector<1x128xf32>
    %6 = vector.broadcast %5 : vector<1x128xf32> to vector<8x128xf32>
    %7 = arith.addf %4, %6 : vector<8x128xf32>
    %cst_8 = arith.constant 0.000000e+00 : f32
    %8 = vector.broadcast %cst_8 : f32 to vector<8x128xf32>
    %9 = arith.maximumf %7, %8 : vector<8x128xf32>
    %c0_9 = arith.constant 0 : index
    %c0_10 = arith.constant 0 : index
    %10 = vector.load %arg5[%c0_9, %c0_10] : memref<8x128xf32, #tpu.memory_space<vmem>>, vector<8x128xf32>
    tpu.vector_store %arg5[%c0_9, %c0_10], %9 {strides = array<i32>} : memref<8x128xf32, #tpu.memory_space<vmem>>, vector<8x128xf32>,
    return
  }
  func.func @transform_0(%arg0: i32) -> (i32, i32) {
    %c0_i32 = arith.constant 0 : i32
    %c0_i32_0 = arith.constant 0 : i32
    return %arg0, %c0_i32 : i32, i32
  }
  func.func @transform_1(%arg0: i32) -> (i32, i32) {
    %c0_i32 = arith.constant 0 : i32
    %c0_i32_0 = arith.constant 0 : i32
    %c0_i32_1 = arith.constant 0 : i32
    return %c0_i32, %c0_i32_0 : i32, i32
  }
  func.func @transform_2(%arg0: i32) -> (i32, i32) {
    %c0_i32 = arith.constant 0 : i32
    %c0_i32_0 = arith.constant 0 : i32
    %c0_i32_1 = arith.constant 0 : i32
    return %c0_i32, %c0_i32_0 : i32, i32
  }
  func.func @transform_3(%arg0: i32) -> (i32, i32) {
    %c0_i32 = arith.constant 0 : i32
    %c0_i32_0 = arith.constant 0 : i32
    %c0_i32_1 = arith.constant 0 : i32
    return %c0_i32, %c0_i32_0 : i32, i32
  }
  func.func @transform_4(%arg0: i32) -> (i32, i32) {
    %c0_i32 = arith.constant 0 : i32
    %c0_i32_0 = arith.constant 0 : i32
    return %arg0, %c0_i32 : i32, i32
  }
}

</mosaic_0001>

<llo_original>
// kernel: tpu_custom_call.1
$region0: #{tpu_custom_call.1}
  #allocation0 [shape = 'u32[]', space=smem, size = 0x4, offset = 0x4, fixed_abs, tag = 'smem constant byte address 0x4 - core index']
  #allocation1 [shape = 'u32[72,128]{1,0:T(1,128)}', space=vmem, size = 0x9000, scoped, tag = 'internal scratch']
  %s0 = inlined_call_operand.hbm [shape: f32[8,128], index: 0, kind: input, shape index: {}]
  %s1 = inlined_call_operand.hbm [shape: f32[128,128], index: 1, kind: input, shape index: {}]
  %s2 = inlined_call_operand.hbm [shape: f32[128,128], index: 2, kind: input, shape index: {}]
  %s3 = inlined_call_operand.vmem [shape: f32[1,128], index: 3, kind: input, shape index: {}]
  %s4 = inlined_call_operand.hbm [shape: f32[8,128], index: 4, kind: output, shape index: {}]
  %s5 = sld [smem:[#allocation0]]
  $region38: #{tpu_custom_call.1} parent=0
    _
  %s7 = ssub.s32 1, %s5
  %s8 = scalar_select 0, %s7, %s5
  $region1: #{tpu_custom_call.1} parent=0
    #allocation2 [shape = 'u8[4096]{0}', space=vmem, size = 0x1000, scoped, tag = 'input window, operand 0, single buffered']
    #allocation3 [shape = 's32[1]{0}', space=sflag, size = 0x4, scoped, tag = 'scoped memory for tpu_custom_call.1']
    #allocation4 [shape = 's32[1]{0}', space=sflag, size = 0x4, scoped, tag = 'scoped memory for tpu_custom_call.1']
    #allocation5 [shape = 'u8[65536]{0}', space=vmem, size = 0x10000, scoped, tag = 'input window, operand 1, single buffered']
    #allocation6 [shape = 's32[1]{0}', space=sflag, size = 0x4, scoped, tag = 'scoped memory for tpu_custom_call.1']
    #allocation7 [shape = 'u8[65536]{0}', space=vmem, size = 0x10000, scoped, tag = 'input window, operand 2, single buffered']
    #allocation8 [shape = 'u8[4096]{0}', space=vmem, size = 0x1000, scoped, tag = 'output window, operand 0, single buffered']
    %9 = vsyncpa [#allocation3], 0
    %10 = vsyncpa [#allocation6], 0
    %11 = vsyncpa [#allocation4], 0
    // Predicated region
    $region2: #{tpu_custom_call.1} parent=1 // pred_check
      _
    $region3: #{tpu_custom_call.1} parent=1 // pred_check_branch
      %13 = sbr.rel (0) target = $region5
    $region4: #{tpu_custom_call.1} parent=1 // pred_region
      %15 = vsyncadd [#allocation3], 0
      %s17 = sshll.u32 %s0, 4
      %s18 = int_to_ptr.hbm [resolvable:$true] %s17
      %s19 = sshll.u32 [#allocation2], 4
      %s20 = int_to_ptr.vmem [resolvable:$true] %s19
      %22 = dma.hbm_to_vmem [thread:$0]  %s18, 128, %s20, [#allocation3]
    $region5: #{tpu_custom_call.1} parent=1 // pred_fallthru
      _
    // Predicated region
    $region6: #{tpu_custom_call.1} parent=1 // pred_check
      _
    $region7: #{tpu_custom_call.1} parent=1 // pred_check_branch
      %24 = sbr.rel (0) target = $region9
    $region8: #{tpu_custom_call.1} parent=1 // pred_region
      %26 = vsyncadd [#allocation6], 0
      %s27 = sshll.u32 %s1, 4
      %s28 = int_to_ptr.hbm [resolvable:$true] %s27
      %s29 = sshll.u32 [#allocation5], 4
      %s30 = int_to_ptr.vmem [resolvable:$true] %s29
      %35 = dma.hbm_to_vmem [thread:$0]  %s28, 2048, %s30, [#allocation6], 128, 128, 8
    $region9: #{tpu_custom_call.1} parent=1 // pred_fallthru
      _
    // Predicated region
    $region10: #{tpu_custom_call.1} parent=1 // pred_check
      _
    $region11: #{tpu_custom_call.1} parent=1 // pred_check_branch
      %37 = sbr.rel (0) target = $region13
    $region12: #{tpu_custom_call.1} parent=1 // pred_region
      %39 = vsyncadd [#allocation6], 0
      %s40 = sshll.u32 %s2, 4
      %s41 = int_to_ptr.hbm [resolvable:$true] %s40
      %s42 = sshll.u32 [#allocation7], 4
      %s43 = int_to_ptr.vmem [resolvable:$true] %s42
      %48 = dma.hbm_to_vmem [thread:$0]  %s41, 2048, %s43, [#allocation6], 128, 128, 8
    $region13: #{tpu_custom_call.1} parent=1 // pred_fallthru
      _
    // Predicated region
    $region14: #{tpu_custom_call.1} parent=1 // pred_check
      _
    $region15: #{tpu_custom_call.1} parent=1 // pred_check_branch
      %50 = sbr.rel (0) target = $region17
    $region16: #{tpu_custom_call.1} parent=1 // pred_region
      _
    $region17: #{tpu_custom_call.1} parent=1 // pred_fallthru
      _
    // Predicated region
    $region18: #{tpu_custom_call.1} parent=1 // pred_check
      _
    $region19: #{tpu_custom_call.1} parent=1 // pred_check_branch
      %52 = sbr.rel (0) target = $region21
    $region20: #{tpu_custom_call.1} parent=1 // pred_region
      %54 = dma.done [#allocation3], 128
    $region21: #{tpu_custom_call.1} parent=1 // pred_fallthru
      _
    // Predicated region
    $region22: #{tpu_custom_call.1} parent=1 // pred_check
      _
    $region23: #{tpu_custom_call.1} parent=1 // pred_check_branch
      %56 = sbr.rel (0) target = $region25
    $region24: #{tpu_custom_call.1} parent=1 // pred_region
      %58 = dma.done [#allocation6], 2048
    $region25: #{tpu_custom_call.1} parent=1 // pred_fallthru
      _
    // Predicated region
    $region26: #{tpu_custom_call.1} parent=1 // pred_check
      _
    $region27: #{tpu_custom_call.1} parent=1 // pred_check_branch
      %60 = sbr.rel (0) target = $region29
    $region28: #{tpu_custom_call.1} parent=1 // pred_region
      %62 = dma.done [#allocation6], 2048
    $region29: #{tpu_custom_call.1} parent=1 // pred_fallthru
      _
    %v63 = vld [vmem:[#allocation2] sm:$0xff]
    %v64 = vld [vmem:[#allocation5] sm:$0xff]
    %v65 = vld [vmem:[#allocation5 + $0x8] sm:$0xff]
    %v66 = vld [vmem:[#allocation5 + $0x10] sm:$0xff]
    %v67 = vld [vmem:[#allocation5 + $0x18] sm:$0xff]
    %v68 = vld [vmem:[#allocation5 + $0x20] sm:$0xff]
    %v69 = vld [vmem:[#allocation5 + $0x28] sm:$0xff]
    %v70 = vld [vmem:[#allocation5 + $0x30] sm:$0xff]
    %v71 = vld [vmem:[#allocation5 + $0x38] sm:$0xff]
    %v72 = vld [vmem:[#allocation5 + $0x40] sm:$0xff]
    %v73 = vld [vmem:[#allocation5 + $0x48] sm:$0xff]
    %v74 = vld [vmem:[#allocation5 + $0x50] sm:$0xff]
    %v75 = vld [vmem:[#allocation5 + $0x58] sm:$0xff]
    %v76 = vld [vmem:[#allocation5 + $0x60] sm:$0xff]
    %v77 = vld [vmem:[#allocation5 + $0x68] sm:$0xff]
    %v78 = vld [vmem:[#allocation5 + $0x70] sm:$0xff]
    %v79 = vld [vmem:[#allocation5 + $0x78] sm:$0xff]
    %80 = vmatpush.msra.mxu0 %v79
    %81 = vmatpush.msra.mxu0 %v78
    %82 = vmatpush.msra.mxu0 %v77
    %83 = vmatpush.msra.mxu0 %v76
    %84 = vmatpush.msra.mxu0 %v75
    %85 = vmatpush.msra.mxu0 %v74
    %86 = vmatpush.msra.mxu0 %v73
    %87 = vmatpush.msra.mxu0 %v72
    %88 = vmatpush.msra.mxu0 %v71
    %89 = vmatpush.msra.mxu0 %v70
    %90 = vmatpush.msra.mxu0 %v69
    %91 = vmatpush.msra.mxu0 %v68
    %92 = vmatpush.msra.mxu0 %v67
    %93 = vmatpush.msra.mxu0 %v66
    %94 = vmatpush.msra.mxu0 %v65
    %95 = vmatpush.msra.mxu0 %v64
    %96 = vmatmul.f32.gmra.mxu0 %v63
    %v97 = vpop.f32.mrf.mxu0
    %v98 = vadd.f32 0.0, %v97
    %99 = vdwg.mxu0
    %v100 = vld [vmem:[#allocation7] sm:$0xff]
    %v101 = vld [vmem:[#allocation7 + $0x8] sm:$0xff]
    %v102 = vld [vmem:[#allocation7 + $0x10] sm:$0xff]
    %v103 = vld [vmem:[#allocation7 + $0x18] sm:$0xff]
    %v104 = vld [vmem:[#allocation7 + $0x20] sm:$0xff]
    %v105 = vld [vmem:[#allocation7 + $0x28] sm:$0xff]
    %v106 = vld [vmem:[#allocation7 + $0x30] sm:$0xff]
    %v107 = vld [vmem:[#allocation7 + $0x38] sm:$0xff]
    %v108 = vld [vmem:[#allocation7 + $0x40] sm:$0xff]
    %v109 = vld [vmem:[#allocation7 + $0x48] sm:$0xff]
    %v110 = vld [vmem:[#allocation7 + $0x50] sm:$0xff]
    %v111 = vld [vmem:[#allocation7 + $0x58] sm:$0xff]
    %v112 = vld [vmem:[#allocation7 + $0x60] sm:$0xff]
    %v113 = vld [vmem:[#allocation7 + $0x68] sm:$0xff]
    %v114 = vld [vmem:[#allocation7 + $0x70] sm:$0xff]
    %v115 = vld [vmem:[#allocation7 + $0x78] sm:$0xff]
    %v116 = vld [vmem:[%s3] sm:$0x1]
    %v118 = vperm.slane %v116, 0
    %120 = vmatpush.msra.mxu0 %v115
    %121 = vmatpush.msra.mxu0 %v114
    %122 = vmatpush.msra.mxu0 %v113
    %123 = vmatpush.msra.mxu0 %v112
    %124 = vmatpush.msra.mxu0 %v111
    %125 = vmatpush.msra.mxu0 %v110
    %126 = vmatpush.msra.mxu0 %v109
    %127 = vmatpush.msra.mxu0 %v108
    %128 = vmatpush.msra.mxu0 %v107
    %129 = vmatpush.msra.mxu0 %v106
    %130 = vmatpush.msra.mxu0 %v105
    %131 = vmatpush.msra.mxu0 %v104
    %132 = vmatpush.msra.mxu0 %v103
    %133 = vmatpush.msra.mxu0 %v102
    %134 = vmatpush.msra.mxu0 %v101
    %135 = vmatpush.msra.mxu0 %v100
    %136 = vmatmul.f32.gmra.mxu0 %v98
    %v137 = vpop.f32.mrf.mxu0
    %v138 = vadd.f32 %v118, %v137
    %139 = vdwg.mxu0
    %v140 = vmax.f32 %v138, 0.0
    %141 = vst [vmem:[#allocation8] sm:$0xff] %v140
    // Predicated region
    $region30: #{tpu_custom_call.1} parent=1 // pred_check
      _
    $region31: #{tpu_custom_call.1} parent=1 // pred_check_branch
      %143 = sbr.rel (0) target = $region33
    $region32: #{tpu_custom_call.1} parent=1 // pred_region
      %145 = vsyncadd [#allocation4], 0
      %s147 = sshll.u32 [#allocation8], 4
      %s148 = int_to_ptr.vmem [resolvable:$true] %s147
      %s149 = sshll.u32 %s4, 4
      %s150 = int_to_ptr.hbm [resolvable:$true] %s149
      %152 = dma.vmem_to_hbm [thread:$0]  %s148, 128, %s150, [#allocation4]
    $region33: #{tpu_custom_call.1} parent=1 // pred_fallthru
      _
    // Predicated region
    $region34: #{tpu_custom_call.1} parent=1 // pred_check
      _
    $region35: #{tpu_custom_call.1} parent=1 // pred_check_branch
      %154 = sbr.rel (0) target = $region37
    $region36: #{tpu_custom_call.1} parent=1 // pred_region
      %156 = dma.done [#allocation4], 128
    $region37: #{tpu_custom_call.1} parent=1 // pred_fallthru
      _
    %157 = vsyncpa [#allocation3], 1
    %158 = vsyncpa [#allocation6], 1
    %159 = vsyncpa [#allocation4], 1

</llo_original>
